<compile_context>
chip_gen: v5e
topology: v5e:2x2
jax: 0.10.0
libtpu: 0.0.40
codegen_flags: <defaults>
</compile_context>

<pallas_src>
import jax
import jax.numpy as jnp
from jax.experimental import pallas as pl
from jax.experimental.pallas import tpu as pltpu


def _requ_kernel(x_ref, o_ref):
    x = x_ref[...]
    r = jnp.maximum(x, jnp.zeros_like(x))   # ReLU on the VPU
    o_ref[...] = r * r                      # square on the VPU (compute dtype == input dtype, like PyTorch)


def requ(x: jax.Array, *, target_block_bytes: int = 2 * 1024 * 1024) -> jax.Array:
    """Elementwise relu(x)**2, computed in a Pallas TPU kernel."""
    orig_shape = x.shape
    dtype = x.dtype
    itemsize = jnp.dtype(dtype).itemsize
    # Native packed tile: (8,128) f32, (16,128) bf16, (32,128) int8/fp8.
    sublane = {4: 8, 2: 16, 1: 32}.get(itemsize, 8)
    LANES = 128

    n = x.size
    x_flat = x.reshape(-1)

    # Pick the widest lane-dense slab width (multiple of 128) that requires NO
    # padding at all (rows come out sublane-aligned); a contiguous reshape is
    # free.  Only if nothing fits do we fall back to a 512-wide slab with a
    # single tiny pad (< sublane * width elements, i.e. a few KiB).
    width = None
    for w in (8 * LANES, 4 * LANES, 2 * LANES, LANES):
        if n % (w * sublane) == 0:
            width = w
            break
    if width is None:
        width = 4 * LANES

    rows = -(-n // width)                    # ceil(n / width)
    rows = -(-rows // sublane) * sublane     # round rows up to sublane granularity
    n_padded = rows * width
    if n_padded != n:
        x_flat = jnp.pad(x_flat, (0, n_padded - n))
    x2d = x_flat.reshape(rows, width)

    # ~2 MiB blocks: in+out, double-buffered = ~4x block, which fits the scoped
    # VMEM default on every generation (v5e 16 MiB, v6e 32 MiB, v7x 32 MiB of
    # 64 MiB physical) with headroom, while amortizing the ~0.35 us/step cost.
    block_rows = (target_block_bytes // (width * itemsize)) // sublane * sublane
    block_rows = max(sublane, min(block_rows, rows))

    # Prefer >= 2 grid steps so v7x's two TensorCores both get work, as long as
    # the halved block is still comfortably large.
    min_block_bytes = 512 * 1024
    if block_rows >= rows and rows >= 2 * sublane:
        half = (rows // 2) // sublane * sublane
        if half * width * itemsize >= min_block_bytes:
            block_rows = half

    grid = (-(-rows // block_rows),)         # cdiv grid; ragged last block OK

    out2d = pl.pallas_call(
        _requ_kernel,
        out_shape=jax.ShapeDtypeStruct((rows, width), dtype),
        grid_spec=pltpu.PrefetchScalarGridSpec(
            num_scalar_prefetch=0,
            grid=grid,
            in_specs=[pl.BlockSpec((block_rows, width), lambda i: (i, 0))],
            out_specs=pl.BlockSpec((block_rows, width), lambda i: (i, 0)),
        ),
        compiler_params=pltpu.CompilerParams(
            dimension_semantics=("parallel",),
        ),
        cost_estimate=pl.CostEstimate(
            flops=2 * n_padded,
            transcendentals=0,
            bytes_accessed=2 * n_padded * itemsize,
        ),
    )(x2d)

    out_flat = out2d.reshape(-1)
    if n_padded != n:
        out_flat = out_flat[:n]
    return out_flat.reshape(orig_shape)


if __name__ == "__main__":
    key = jax.random.PRNGKey(0)
    # NCHW, small shapes: batch=2, channels=4, spatial=16x16
    x = jax.random.normal(key, (2, 4, 16, 16), dtype=jnp.float32)

    y = requ(x)
    jax.block_until_ready(y)

    # Correctness check against the pure-JAX reference.
    y_ref = jnp.maximum(x, 0.0) ** 2
    assert y.shape == x.shape and y.dtype == x.dtype
    assert jnp.allclose(y, y_ref)

    print("KERNEL_OK")
</pallas_src>

<mosaic_0001>
module attributes {stable_mosaic.version = 11 : i64} {
  func.func @_requ_kernel(%arg0: i32, %arg1: memref<8x256xf32, #tpu.memory_space<vmem>>, %arg2: memref<8x256xf32, #tpu.memory_space<vmem>>) attributes {dimension_semantics = [#tpu.dimension_semantics<parallel>], iteration_bounds = array<i64: 1>, scalar_prefetch = 0 : i64, scratch_operands = 0 : i64, tpu.core_type = #tpu.core_type<tc>, window_params = [{transform_indices = @transform_0, window_bounds = array<i64: 8, 256>}, {transform_indices = @transform_1, window_bounds = array<i64: 8, 256>}]} {
    %c0 = arith.constant 0 : index
    %c0_0 = arith.constant 0 : index
    %0 = vector.load %arg1[%c0, %c0_0] : memref<8x256xf32, #tpu.memory_space<vmem>>, vector<8x256xf32>
    %cst = arith.constant 0.000000e+00 : f32
    %1 = vector.broadcast %cst : f32 to vector<8x256xf32>
    %2 = arith.maximumf %0, %1 : vector<8x256xf32>
    %3 = arith.mulf %2, %2 : vector<8x256xf32>
    %c0_1 = arith.constant 0 : index
    %c0_2 = arith.constant 0 : index
    %4 = vector.load %arg2[%c0_1, %c0_2] : memref<8x256xf32, #tpu.memory_space<vmem>>, vector<8x256xf32>
    tpu.vector_store %arg2[%c0_1, %c0_2], %3 {strides = array<i32>} : memref<8x256xf32, #tpu.memory_space<vmem>>, vector<8x256xf32>,
    return
  }
  func.func @transform_0(%arg0: i32) -> (i32, i32) {
    %c0_i32 = arith.constant 0 : i32
    %c0_i32_0 = arith.constant 0 : i32
    return %arg0, %c0_i32 : i32, i32
  }
  func.func @transform_1(%arg0: i32) -> (i32, i32) {
    %c0_i32 = arith.constant 0 : i32
    %c0_i32_0 = arith.constant 0 : i32
    return %arg0, %c0_i32 : i32, i32
  }
}

</mosaic_0001>

<llo_original>
// kernel: tpu_custom_call.1
$region0: #{tpu_custom_call.1}
  #allocation0 [shape = 'u32[]', space=smem, size = 0x4, offset = 0x4, fixed_abs, tag = 'smem constant byte address 0x4 - core index']
  #allocation1 [shape = 'u32[72,128]{1,0:T(1,128)}', space=vmem, size = 0x9000, scoped, tag = 'internal scratch']
  %s0 = inlined_call_operand.hbm [shape: f32[8,256], index: 0, kind: input, shape index: {}]
  %s1 = inlined_call_operand.hbm [shape: f32[8,256], index: 1, kind: output, shape index: {}]
  %s2 = sld [smem:[#allocation0]]
  $region18: #{tpu_custom_call.1} parent=0
    _
  %s4 = ssub.s32 1, %s2
  %s5 = scalar_select 0, %s4, %s2
  $region1: #{tpu_custom_call.1} parent=0
    #allocation2 [shape = 'u8[8192]{0}', space=vmem, size = 0x2000, scoped, tag = 'input window, operand 0, single buffered']
    #allocation3 [shape = 's32[1]{0}', space=sflag, size = 0x4, scoped, tag = 'scoped memory for tpu_custom_call.1']
    #allocation4 [shape = 's32[1]{0}', space=sflag, size = 0x4, scoped, tag = 'scoped memory for tpu_custom_call.1']
    #allocation5 [shape = 'u8[8192]{0}', space=vmem, size = 0x2000, scoped, tag = 'output window, operand 0, single buffered']
    %6 = vsyncpa [#allocation3], 0
    %7 = vsyncpa [#allocation4], 0
    // Predicated region
    $region2: #{tpu_custom_call.1} parent=1 // pred_check
      _
    $region3: #{tpu_custom_call.1} parent=1 // pred_check_branch
      %9 = sbr.rel (0) target = $region5
    $region4: #{tpu_custom_call.1} parent=1 // pred_region
      %11 = vsyncadd [#allocation3], 0
      %s13 = sshll.u32 %s0, 4
      %s14 = int_to_ptr.hbm [resolvable:$true] %s13
      %s15 = sshll.u32 [#allocation2], 4
      %s16 = int_to_ptr.vmem [resolvable:$true] %s15
      %18 = dma.hbm_to_vmem [thread:$0]  %s14, 256, %s16, [#allocation3]
    $region5: #{tpu_custom_call.1} parent=1 // pred_fallthru
      _
    // Predicated region
    $region6: #{tpu_custom_call.1} parent=1 // pred_check
      _
    $region7: #{tpu_custom_call.1} parent=1 // pred_check_branch
      %20 = sbr.rel (0) target = $region9
    $region8: #{tpu_custom_call.1} parent=1 // pred_region
      %22 = dma.done [#allocation3], 256
    $region9: #{tpu_custom_call.1} parent=1 // pred_fallthru
      _
    %v23 = vld [vmem:[#allocation2] sm:$0xff]
    %v24 = vld [vmem:[#allocation2 + $0x8] sm:$0xff]
    %v25 = vmax.f32 %v23, 0.0
    %v26 = vmax.f32 %v24, 0.0
    %v27 = vmul.f32 %v25, %v25
    %v28 = vmul.f32 %v26, %v26
    %29 = vst [vmem:[#allocation5] sm:$0xff] %v27
    %30 = vst [vmem:[#allocation5 + $0x8] sm:$0xff] %v28
    // Predicated region
    $region10: #{tpu_custom_call.1} parent=1 // pred_check
      _
    $region11: #{tpu_custom_call.1} parent=1 // pred_check_branch
      %32 = sbr.rel (0) target = $region13
    $region12: #{tpu_custom_call.1} parent=1 // pred_region
      %34 = vsyncadd [#allocation4], 0
      %s36 = sshll.u32 [#allocation5], 4
      %s37 = int_to_ptr.vmem [resolvable:$true] %s36
      %s38 = sshll.u32 %s1, 4
      %s39 = int_to_ptr.hbm [resolvable:$true] %s38
      %41 = dma.vmem_to_hbm [thread:$0]  %s37, 256, %s39, [#allocation4]
    $region13: #{tpu_custom_call.1} parent=1 // pred_fallthru
      _
    // Predicated region
    $region14: #{tpu_custom_call.1} parent=1 // pred_check
      _
    $region15: #{tpu_custom_call.1} parent=1 // pred_check_branch
      %43 = sbr.rel (0) target = $region17
    $region16: #{tpu_custom_call.1} parent=1 // pred_region
      %45 = dma.done [#allocation4], 256
    $region17: #{tpu_custom_call.1} parent=1 // pred_fallthru
      _
    %46 = vsyncpa [#allocation3], 1
    %47 = vsyncpa [#allocation4], 1

</llo_original>
